<compile_context>
chip_gen: v7x
topology: tpu7x:2x2x1
jax: 0.10.0
libtpu: 0.0.40
codegen_flags: <defaults>
</compile_context>

<pallas_src>
import functools

import jax
import jax.numpy as jnp
from jax.experimental import pallas as pl
from jax.experimental.pallas import tpu as pltpu


def convresblock_kernel(H, W, num_layers, x_ref, w_ref, b_ref, o_ref, epad_ref):
    """One batch element per grid step, channels-first, spatial flattened.

    x_ref   : (1, C, H*W)        input image (lane axis = H*W, lane-dense)
    w_ref   : (L, C, 9*C)        per-layer conv weights, column = (kh*3+kw)*C + ci
    b_ref   : (L, C, 1)          per-layer biases
    o_ref   : (1, C, H*W)        output (lane-dense)
    epad_ref: (C, (H+2)*W + 2)   VMEM scratch: zero-padded working image.
                                 Element q = 1 + (h+1)*W + w holds e[c, h, w];
                                 padded rows h = -1 and h = H (plus the two
                                 extra end slots) stay zero and provide the
                                 vertical conv padding.
    """
    C = x_ref.shape[1]
    HW = H * W
    PW = (H + 2) * W + 2
    interior = W + 1                      # flattened offset of pixel (0, 0)

    x = x_ref[0].astype(jnp.float32)      # (C, HW) residual input

    # Zero the padded working buffer once, then drop x into its interior.
    epad_ref[...] = jnp.zeros((C, PW), jnp.float32)
    epad_ref[:, interior:interior + HW] = x

    # Horizontal-edge masks (vertical edges are handled by the zero pad rows).
    col = jax.lax.broadcasted_iota(jnp.int32, (C, HW), 1) % W
    not_left = col != 0                   # source invalid when dw == -1
    not_right = col != (W - 1)            # source invalid when dw == +1

    e = x
    for l in range(num_layers):
        # im2col on the fly: the 9 kernel taps are contiguous lane slices of
        # the padded buffer; stack them into one (9*C, HW) patch slab.
        taps = []
        for dh in (-1, 0, 1):
            for dw in (-1, 0, 1):
                s = interior + dh * W + dw
                t = epad_ref[:, s:s + HW]             # (C, HW) == e[:, h+dh, w+dw]
                if dw == -1:
                    t = jnp.where(not_left, t, 0.0)
                elif dw == 1:
                    t = jnp.where(not_right, t, 0.0)
                taps.append(t)
        patches = jnp.concatenate(taps, axis=0)        # (9*C, HW)

        # One lane-dense MXU matmul per conv layer: (C, 9*C) @ (9*C, HW).
        e = jnp.dot(w_ref[l], patches,
                    preferred_element_type=jnp.float32) + b_ref[l]

        if l < num_layers - 1:
            e = jnp.maximum(e, 0.0)                    # activation between layers
            epad_ref[:, interior:interior + HW] = e    # feed the next conv layer

    out = jnp.maximum(e + x, 0.0)                      # activation(e + x)
    o_ref[0] = out.astype(o_ref.dtype)


def convresblock_forward(x_nchw, weights, biases):
    """ConvResBlock forward (conv3x3, batch_norm=False, dropout=False, ReLU).

    x_nchw : (N, C, H, W)    float32, PyTorch NCHW layout
    weights: (L, C, C, 3, 3) per-layer nn.Conv2d weights, PyTorch OIHW layout
    biases : (L, C)
    returns: (N, C, H, W)
    """
    N, C, H, W = x_nchw.shape
    L = weights.shape[0]
    HW = H * W

    # Free row-major views only — no activation transposes around the kernel.
    x_flat = x_nchw.reshape(N, C, HW)

    # Re-order the PyTorch (Cout, Cin, kh, kw) weights once (tiny XLA op) so
    # that column index (kh*3 + kw)*Cin + ci matches the kernel's tap order.
    w_mat = jnp.transpose(weights, (0, 1, 3, 4, 2)).reshape(L, C, 9 * C)
    b_mat = biases.reshape(L, C, 1)

    kernel = functools.partial(convresblock_kernel, H, W, L)

    out_flat = pl.pallas_call(
        kernel,
        out_shape=jax.ShapeDtypeStruct((N, C, HW), x_nchw.dtype),
        grid=(N,),
        in_specs=[
            pl.BlockSpec((1, C, HW), lambda n: (n, 0, 0)),
            pl.BlockSpec((L, C, 9 * C), lambda n: (0, 0, 0)),
            pl.BlockSpec((L, C, 1), lambda n: (0, 0, 0)),
        ],
        out_specs=pl.BlockSpec((1, C, HW), lambda n: (n, 0, 0)),
        scratch_shapes=[pltpu.VMEM((C, (H + 2) * W + 2), jnp.float32)],
        compiler_params=pltpu.CompilerParams(
            dimension_semantics=("parallel",),   # N=2: keeps both v7x TCs busy
            vmem_limit_bytes=32 * 1024 * 1024,
        ),
    )(x_flat, w_mat, b_mat)

    return out_flat.reshape(N, C, H, W)


def convresblock_reference(x, weights, biases):
    """Pure-JAX reference matching PyTorch ConvResBlock.forward exactly
    (conv1x1=False, batch_norm=False, dropout=False, activation=ReLU)."""
    e = x + 0
    L = weights.shape[0]
    for l in range(L):
        e = jax.lax.conv_general_dilated(
            e, weights[l], window_strides=(1, 1), padding=((1, 1), (1, 1)),
            dimension_numbers=("NCHW", "OIHW", "NCHW"),
            precision=jax.lax.Precision.HIGHEST)
        e = e + biases[l][None, :, None, None]
        if l < L - 1:
            e = jax.nn.relu(e)
    return jax.nn.relu(e + x)


if __name__ == "__main__":
    # Small representative config: dim=8, num_layers=2, activation=ReLU,
    # batch_norm=False, dropout=False, conv1x1=False (default 3x3 convs).
    N, C, H, W = 2, 8, 16, 16
    L = 2

    key = jax.random.PRNGKey(0)
    kx, kw, kb = jax.random.split(key, 3)

    x = jax.random.normal(kx, (N, C, H, W), dtype=jnp.float32)

    # nn.Conv2d default init: U(+-1/sqrt(fan_in)), fan_in = C*3*3.
    bound = 1.0 / jnp.sqrt(jnp.float32(C * 3 * 3))
    weights = jax.random.uniform(kw, (L, C, C, 3, 3), jnp.float32, -bound, bound)
    biases = jax.random.uniform(kb, (L, C), jnp.float32, -bound, bound)

    out = jax.block_until_ready(convresblock_forward(x, weights, biases))
    ref = jax.block_until_ready(convresblock_reference(x, weights, biases))

    assert out.shape == (N, C, H, W), out.shape
    # Tolerance covers MXU f32-pass vs XLA conv differences; any real bug
    # (wrong tap / mask / bias / residual) shows errors >= 5e-2.
    max_err = float(jnp.max(jnp.abs(out - ref)))
    assert jnp.allclose(out, ref, atol=1e-2, rtol=1e-2), f"mismatch, max_err={max_err}"

    print("KERNEL_OK")
</pallas_src>

<mosaic_0001>
module attributes {stable_mosaic.version = 11 : i64} {
  func.func @convresblock_kernel(%arg0: i32, %arg1: memref<1x8x256xf32, #tpu.memory_space<vmem>>, %arg2: memref<2x8x72xf32, #tpu.memory_space<vmem>>, %arg3: memref<2x8x1xf32, #tpu.memory_space<vmem>>, %arg4: memref<1x8x256xf32, #tpu.memory_space<vmem>>, %arg5: memref<8x290xf32, #tpu.memory_space<vmem>>) attributes {dimension_semantics = [#tpu.dimension_semantics<parallel>], iteration_bounds = array<i64: 2>, scalar_prefetch = 0 : i64, scratch_operands = 1 : i64, tpu.core_type = #tpu.core_type<tc>, window_params = [{transform_indices = @transform_0, window_bounds = array<i64: 1, 8, 256>}, {pipeline_mode = #tpu.pipeline_mode<synchronous>, transform_indices = @transform_1, window_bounds = array<i64: 2, 8, 72>}, {pipeline_mode = #tpu.pipeline_mode<synchronous>, transform_indices = @transform_2, window_bounds = array<i64: 2, 8, 1>}, {transform_indices = @transform_3, window_bounds = array<i64: 1, 8, 256>}]} {
    %c0 = arith.constant 0 : index
    %c0_0 = arith.constant 0 : index
    %c0_1 = arith.constant 0 : index
    %0 = vector.load %arg1[%c0, %c0_0, %c0_1] : memref<1x8x256xf32, #tpu.memory_space<vmem>>, vector<1x8x256xf32>
    %1 = vector.shape_cast %0 : vector<1x8x256xf32> to vector<8x256xf32>
    %cst = arith.constant 0.000000e+00 : f32
    %2 = vector.broadcast %cst : f32 to vector<8x290xf32>
    %c0_2 = arith.constant 0 : index
    %c0_3 = arith.constant 0 : index
    %3 = vector.load %arg5[%c0_2, %c0_3] : memref<8x290xf32, #tpu.memory_space<vmem>>, vector<8x290xf32>
    tpu.vector_store %arg5[%c0_2, %c0_3], %2 {strides = array<i32>} : memref<8x290xf32, #tpu.memory_space<vmem>>, vector<8x290xf32>,
    %c0_4 = arith.constant 0 : index
    %c17 = arith.constant 17 : index
    %4 = vector.load %arg5[%c0_4, %c17] : memref<8x290xf32, #tpu.memory_space<vmem>>, vector<8x256xf32>
    tpu.vector_store %arg5[%c0_4, %c17], %1 {strides = array<i32>} : memref<8x290xf32, #tpu.memory_space<vmem>>, vector<8x256xf32>,
    %5 = tpu.iota {dimensions = array<i32: 1>} : vector<8x256xi32>
    %c16_i32 = arith.constant 16 : i32
    %c0_i32 = arith.constant 0 : i32
    %6 = arith.cmpi eq, %c16_i32, %c0_i32 : i32
    %c1_i32 = arith.constant 1 : i32
    %7 = arith.select %6, %c1_i32, %c16_i32 : i32
    %8 = vector.broadcast %7 : i32 to vector<8x256xi32>
    %9 = arith.remsi %5, %8 : vector<8x256xi32>
    %c0_i32_5 = arith.constant 0 : i32
    %10 = vector.broadcast %c0_i32_5 : i32 to vector<8x256xi32>
    %11 = arith.cmpi ne, %9, %10 : vector<8x256xi32>
    %c0_i32_6 = arith.constant 0 : i32
    %12 = vector.broadcast %c0_i32_6 : i32 to vector<8x256xi32>
    %13 = arith.cmpi slt, %9, %12 : vector<8x256xi32>
    %c0_i32_7 = arith.constant 0 : i32
    %14 = arith.cmpi slt, %7, %c0_i32_7 : i32
    %15 = vector.broadcast %14 : i1 to vector<8x256xi1>
    %16 = vector.broadcast %15 : vector<8x256xi1> to vector<8x256xi1>
    %17 = arith.xori %13, %16 : vector<8x256xi1>
    %18 = arith.andi %17, %11 : vector<8x256xi1>
    %19 = vector.broadcast %7 : i32 to vector<8x256xi32>
    %20 = arith.addi %9, %19 : vector<8x256xi32>
    %21 = arith.select %18, %20, %9 : vector<8x256xi1>, vector<8x256xi32>
    %c0_i32_8 = arith.constant 0 : i32
    %22 = vector.broadcast %c0_i32_8 : i32 to vector<8x256xi32>
    %23 = arith.cmpi ne, %21, %22 : vector<8x256xi32>
    %c15_i32 = arith.constant 15 : i32
    %24 = vector.broadcast %c15_i32 : i32 to vector<8x256xi32>
    %25 = arith.cmpi ne, %21, %24 : vector<8x256xi32>
    %c0_9 = arith.constant 0 : index
    %c0_10 = arith.constant 0 : index
    %26 = vector.load %arg5[%c0_9, %c0_10] : memref<8x290xf32, #tpu.memory_space<vmem>>, vector<8x256xf32>
    %cst_11 = arith.constant 0.000000e+00 : f32
    %27 = vector.broadcast %cst_11 : f32 to vector<8x256xf32>
    %28 = arith.select %23, %26, %27 : vector<8x256xi1>, vector<8x256xf32>
    %c0_12 = arith.constant 0 : index
    %c1 = arith.constant 1 : index
    %29 = vector.load %arg5[%c0_12, %c1] : memref<8x290xf32, #tpu.memory_space<vmem>>, vector<8x256xf32>
    %c0_13 = arith.constant 0 : index
    %c2 = arith.constant 2 : index
    %30 = vector.load %arg5[%c0_13, %c2] : memref<8x290xf32, #tpu.memory_space<vmem>>, vector<8x256xf32>
    %cst_14 = arith.constant 0.000000e+00 : f32
    %31 = vector.broadcast %cst_14 : f32 to vector<8x256xf32>
    %32 = arith.select %25, %30, %31 : vector<8x256xi1>, vector<8x256xf32>
    %c0_15 = arith.constant 0 : index
    %c16 = arith.constant 16 : index
    %33 = vector.load %arg5[%c0_15, %c16] : memref<8x290xf32, #tpu.memory_space<vmem>>, vector<8x256xf32>
    %cst_16 = arith.constant 0.000000e+00 : f32
    %34 = vector.broadcast %cst_16 : f32 to vector<8x256xf32>
    %35 = arith.select %23, %33, %34 : vector<8x256xi1>, vector<8x256xf32>
    %c0_17 = arith.constant 0 : index
    %c17_18 = arith.constant 17 : index
    %36 = vector.load %arg5[%c0_17, %c17_18] : memref<8x290xf32, #tpu.memory_space<vmem>>, vector<8x256xf32>
    %c0_19 = arith.constant 0 : index
    %c18 = arith.constant 18 : index
    %37 = vector.load %arg5[%c0_19, %c18] : memref<8x290xf32, #tpu.memory_space<vmem>>, vector<8x256xf32>
    %cst_20 = arith.constant 0.000000e+00 : f32
    %38 = vector.broadcast %cst_20 : f32 to vector<8x256xf32>
    %39 = arith.select %25, %37, %38 : vector<8x256xi1>, vector<8x256xf32>
    %c0_21 = arith.constant 0 : index
    %c32 = arith.constant 32 : index
    %40 = vector.load %arg5[%c0_21, %c32] : memref<8x290xf32, #tpu.memory_space<vmem>>, vector<8x256xf32>
    %cst_22 = arith.constant 0.000000e+00 : f32
    %41 = vector.broadcast %cst_22 : f32 to vector<8x256xf32>
    %42 = arith.select %23, %40, %41 : vector<8x256xi1>, vector<8x256xf32>
    %c0_23 = arith.constant 0 : index
    %c33 = arith.constant 33 : index
    %43 = vector.load %arg5[%c0_23, %c33] : memref<8x290xf32, #tpu.memory_space<vmem>>, vector<8x256xf32>
    %c0_24 = arith.constant 0 : index
    %c34 = arith.constant 34 : index
    %44 = vector.load %arg5[%c0_24, %c34] : memref<8x290xf32, #tpu.memory_space<vmem>>, vector<8x256xf32>
    %cst_25 = arith.constant 0.000000e+00 : f32
    %45 = vector.broadcast %cst_25 : f32 to vector<8x256xf32>
    %46 = arith.select %25, %44, %45 : vector<8x256xi1>, vector<8x256xf32>
    %47 = tpu.concatenate %28, %29, %32, %35, %36, %39, %42, %43, %46 in 0 : vector<8x256xf32>, vector<8x256xf32>, vector<8x256xf32>, vector<8x256xf32>, vector<8x256xf32>, vector<8x256xf32>, vector<8x256xf32>, vector<8x256xf32>, vector<8x256xf32> -> vector<72x256xf32>
    %c0_26 = arith.constant 0 : index
    %c0_27 = arith.constant 0 : index
    %c0_28 = arith.constant 0 : index
    %48 = vector.load %arg2[%c0_26, %c0_27, %c0_28] : memref<2x8x72xf32, #tpu.memory_space<vmem>>, vector<1x8x72xf32>
    %49 = vector.shape_cast %48 : vector<1x8x72xf32> to vector<8x72xf32>
    %cst_29 = arith.constant dense<0.000000e+00> : vector<8x256xf32>
    %50 = tpu.matmul %49, %47, %cst_29 {dimension_numbers = #tpu.dot_dimension_numbers<[1], [0], [0], [1], [0, 0, 1, 1], [], []>} : vector<8x72xf32>, vector<72x256xf32>, vector<8x256xf32> -> vector<8x256xf32>
    %c0_30 = arith.constant 0 : index
    %c0_31 = arith.constant 0 : index
    %c0_32 = arith.constant 0 : index
    %51 = vector.load %arg3[%c0_30, %c0_31, %c0_32] : memref<2x8x1xf32, #tpu.memory_space<vmem>>, vector<1x8x1xf32>
    %52 = vector.shape_cast %51 : vector<1x8x1xf32> to vector<8x1xf32>
    %53 = vector.broadcast %52 : vector<8x1xf32> to vector<8x256xf32>
    %54 = arith.addf %50, %53 : vector<8x256xf32>
    %cst_33 = arith.constant 0.000000e+00 : f32
    %55 = vector.broadcast %cst_33 : f32 to vector<8x256xf32>
    %56 = arith.maximumf %54, %55 : vector<8x256xf32>
    %c0_34 = arith.constant 0 : index
    %c17_35 = arith.constant 17 : index
    %57 = vector.load %arg5[%c0_34, %c17_35] : memref<8x290xf32, #tpu.memory_space<vmem>>, vector<8x256xf32>
    tpu.vector_store %arg5[%c0_34, %c17_35], %56 {strides = array<i32>} : memref<8x290xf32, #tpu.memory_space<vmem>>, vector<8x256xf32>,
    %c0_36 = arith.constant 0 : index
    %c0_37 = arith.constant 0 : index
    %58 = vector.load %arg5[%c0_36, %c0_37] : memref<8x290xf32, #tpu.memory_space<vmem>>, vector<8x256xf32>
    %cst_38 = arith.constant 0.000000e+00 : f32
    %59 = vector.broadcast %cst_38 : f32 to vector<8x256xf32>
    %60 = arith.select %23, %58, %59 : vector<8x256xi1>, vector<8x256xf32>
    %c0_39 = arith.constant 0 : index
    %c1_40 = arith.constant 1 : index
    %61 = vector.load %arg5[%c0_39, %c1_40] : memref<8x290xf32, #tpu.memory_space<vmem>>, vector<8x256xf32>
    %c0_41 = arith.constant 0 : index
    %c2_42 = arith.constant 2 : index
    %62 = vector.load %arg5[%c0_41, %c2_42] : memref<8x290xf32, #tpu.memory_space<vmem>>, vector<8x256xf32>
    %cst_43 = arith.constant 0.000000e+00 : f32
    %63 = vector.broadcast %cst_43 : f32 to vector<8x256xf32>
    %64 = arith.select %25, %62, %63 : vector<8x256xi1>, vector<8x256xf32>
    %c0_44 = arith.constant 0 : index
    %c16_45 = arith.constant 16 : index
    %65 = vector.load %arg5[%c0_44, %c16_45] : memref<8x290xf32, #tpu.memory_space<vmem>>, vector<8x256xf32>
    %cst_46 = arith.constant 0.000000e+00 : f32
    %66 = vector.broadcast %cst_46 : f32 to vector<8x256xf32>
    %67 = arith.select %23, %65, %66 : vector<8x256xi1>, vector<8x256xf32>
    %c0_47 = arith.constant 0 : index
    %c17_48 = arith.constant 17 : index
    %68 = vector.load %arg5[%c0_47, %c17_48] : memref<8x290xf32, #tpu.memory_space<vmem>>, vector<8x256xf32>
    %c0_49 = arith.constant 0 : index
    %c18_50 = arith.constant 18 : index
    %69 = vector.load %arg5[%c0_49, %c18_50] : memref<8x290xf32, #tpu.memory_space<vmem>>, vector<8x256xf32>
    %cst_51 = arith.constant 0.000000e+00 : f32
    %70 = vector.broadcast %cst_51 : f32 to vector<8x256xf32>
    %71 = arith.select %25, %69, %70 : vector<8x256xi1>, vector<8x256xf32>
    %c0_52 = arith.constant 0 : index
    %c32_53 = arith.constant 32 : index
    %72 = vector.load %arg5[%c0_52, %c32_53] : memref<8x290xf32, #tpu.memory_space<vmem>>, vector<8x256xf32>
    %cst_54 = arith.constant 0.000000e+00 : f32
    %73 = vector.broadcast %cst_54 : f32 to vector<8x256xf32>
    %74 = arith.select %23, %72, %73 : vector<8x256xi1>, vector<8x256xf32>
    %c0_55 = arith.constant 0 : index
    %c33_56 = arith.constant 33 : index
    %75 = vector.load %arg5[%c0_55, %c33_56] : memref<8x290xf32, #tpu.memory_space<vmem>>, vector<8x256xf32>
    %c0_57 = arith.constant 0 : index
    %c34_58 = arith.constant 34 : index
    %76 = vector.load %arg5[%c0_57, %c34_58] : memref<8x290xf32, #tpu.memory_space<vmem>>, vector<8x256xf32>
    %cst_59 = arith.constant 0.000000e+00 : f32
    %77 = vector.broadcast %cst_59 : f32 to vector<8x256xf32>
    %78 = arith.select %25, %76, %77 : vector<8x256xi1>, vector<8x256xf32>
    %79 = tpu.concatenate %60, %61, %64, %67, %68, %71, %74, %75, %78 in 0 : vector<8x256xf32>, vector<8x256xf32>, vector<8x256xf32>, vector<8x256xf32>, vector<8x256xf32>, vector<8x256xf32>, vector<8x256xf32>, vector<8x256xf32>, vector<8x256xf32> -> vector<72x256xf32>
    %c1_60 = arith.constant 1 : index
    %c0_61 = arith.constant 0 : index
    %c0_62 = arith.constant 0 : index
    %80 = vector.load %arg2[%c1_60, %c0_61, %c0_62] : memref<2x8x72xf32, #tpu.memory_space<vmem>>, vector<1x8x72xf32>
    %81 = vector.shape_cast %80 : vector<1x8x72xf32> to vector<8x72xf32>
    %cst_63 = arith.constant dense<0.000000e+00> : vector<8x256xf32>
    %82 = tpu.matmul %81, %79, %cst_63 {dimension_numbers = #tpu.dot_dimension_numbers<[1], [0], [0], [1], [0, 0, 1, 1], [], []>} : vector<8x72xf32>, vector<72x256xf32>, vector<8x256xf32> -> vector<8x256xf32>
    %c1_64 = arith.constant 1 : index
    %c0_65 = arith.constant 0 : index
    %c0_66 = arith.constant 0 : index
    %83 = vector.load %arg3[%c1_64, %c0_65, %c0_66] : memref<2x8x1xf32, #tpu.memory_space<vmem>>, vector<1x8x1xf32>
    %84 = vector.shape_cast %83 : vector<1x8x1xf32> to vector<8x1xf32>
    %85 = vector.broadcast %84 : vector<8x1xf32> to vector<8x256xf32>
    %86 = arith.addf %82, %85 : vector<8x256xf32>
    %87 = arith.addf %86, %1 : vector<8x256xf32>
    %cst_67 = arith.constant 0.000000e+00 : f32
    %88 = vector.broadcast %cst_67 : f32 to vector<8x256xf32>
    %89 = arith.maximumf %87, %88 : vector<8x256xf32>
    %c0_68 = arith.constant 0 : index
    %c0_69 = arith.constant 0 : index
    %c0_70 = arith.constant 0 : index
    %90 = vector.load %arg4[%c0_68, %c0_69, %c0_70] : memref<1x8x256xf32, #tpu.memory_space<vmem>>, vector<1x8x256xf32>
    %91 = vector.shape_cast %90 : vector<1x8x256xf32> to vector<8x256xf32>
    %92 = vector.shape_cast %89 : vector<8x256xf32> to vector<1x8x256xf32>
    tpu.vector_store %arg4[%c0_68, %c0_69, %c0_70], %92 {strides = array<i32>} : memref<1x8x256xf32, #tpu.memory_space<vmem>>, vector<1x8x256xf32>,
    return
  }
  func.func @transform_0(%arg0: i32) -> (i32, i32, i32) {
    %c0_i32 = arith.constant 0 : i32
    %c0_i32_0 = arith.constant 0 : i32
    %c0_i32_1 = arith.constant 0 : i32
    return %arg0, %c0_i32, %c0_i32_0 : i32, i32, i32
  }
  func.func @transform_1(%arg0: i32) -> (i32, i32, i32) {
    %c0_i32 = arith.constant 0 : i32
    %c0_i32_0 = arith.constant 0 : i32
    %c0_i32_1 = arith.constant 0 : i32
    %c0_i32_2 = arith.constant 0 : i32
    return %c0_i32, %c0_i32_0, %c0_i32_1 : i32, i32, i32
  }
  func.func @transform_2(%arg0: i32) -> (i32, i32, i32) {
    %c0_i32 = arith.constant 0 : i32
    %c0_i32_0 = arith.constant 0 : i32
    %c0_i32_1 = arith.constant 0 : i32
    %c0_i32_2 = arith.constant 0 : i32
    return %c0_i32, %c0_i32_0, %c0_i32_1 : i32, i32, i32
  }
  func.func @transform_3(%arg0: i32) -> (i32, i32, i32) {
    %c0_i32 = arith.constant 0 : i32
    %c0_i32_0 = arith.constant 0 : i32
    %c0_i32_1 = arith.constant 0 : i32
    return %arg0, %c0_i32, %c0_i32_0 : i32, i32, i32
  }
}

</mosaic_0001>

<llo_original>
// kernel: tpu_custom_call.1
$region0: #{tpu_custom_call.1}
  #allocation0 [shape = 'u32[]', space=smem, size = 0x4, offset = 0x4, fixed_abs, tag = 'smem constant byte address 0x4 - core index']
  #allocation1 [shape = 'u32[144,128]{1,0:T(1,128)}', space=vmem, size = 0x12000, scoped, tag = 'internal scratch']
  #allocation2 [shape = 'f32[8,290]{1,0:T(8,128)}', space=vmem, size = 0x3000, scoped, tag = 'scratch operand']
  %s0 = inlined_call_operand.hbm [shape: f32[2,8,256], index: 0, kind: input, shape index: {}]
  %s1 = inlined_call_operand.vmem [shape: f32[2,8,72], index: 1, kind: input, shape index: {}]
  %s2 = inlined_call_operand.vmem [shape: f32[2,8,1], index: 2, kind: input, shape index: {}]
  %s3 = inlined_call_operand.hbm [shape: f32[2,8,256], index: 3, kind: output, shape index: {}]
  %s4 = sld [smem:[#allocation0]]
  $region49: #{tpu_custom_call.1} parent=0
    _
  %s6 = ssub.s32 1, %s4
  %s7 = scalar_select 0, %s6, %s4
  $region1: #{tpu_custom_call.1} parent=0
    #allocation3 [shape = 'u8[16384]{0}', space=vmem, size = 0x4000, scoped, tag = 'input window, operand 0']
    #allocation4 [shape = 's32[2]{0}', space=sflag, size = 0x8, scoped, tag = 'scoped memory for tpu_custom_call.1']
    #allocation5 [shape = 's32[2]{0}', space=sflag, size = 0x8, scoped, tag = 'scoped memory for tpu_custom_call.1']
    #allocation6 [shape = 'u8[16384]{0}', space=vmem, size = 0x4000, scoped, tag = 'output window, operand 0']
    %8 = vsyncpa [#allocation4], 0
    %s9 = scalar_lea.sflag [#allocation4], 1
    %10 = vsyncpa %s9, 0
    %11 = vsyncpa [#allocation5], 0
    %s12 = scalar_lea.sflag [#allocation5], 1
    %13 = vsyncpa %s12, 0
    loop: start=0, step=1, limit=4
    $region2: #{tpu_custom_call.1} parent=1 // loop_pre_header
      _
    $region3: #{tpu_custom_call.1} parent=1 // loop_header
      %s15 = sphi 0, %s19
      %p16 = scmp.ge.s32.totalorder %s15, 4
      %s25 = sphi 0, %s27
      %s28 = sphi 0, %s25
      %s29 = sphi 0, %s28
      %s45 = sphi 0, %s29
      %s49 = sphi 0, %s49
      %s51 = sphi 0, %s49
      %s52 = sphi 0, %s51
      %s66 = sphi 0, %s52
      %s70 = sphi 0, %s70
      %s72 = sphi 0, %s70
      %s73 = sphi 0, %s72
      %s87 = sphi 0, %s73
      %s93 = sphi 0, %s95
      %s96 = sphi 0, %s93
      %s97 = sphi 0, %s96
      %s113 = sphi 0, %s97
    $region4: #{tpu_custom_call.1} parent=1 // loop_header_branch
      %18 = sbr.rel (%p16) target = $region8
    $region5: #{tpu_custom_call.1} parent=1 // loop_body
      %s20 = ssub.s32 %s15, 1
      %s21 = ssub.s32 %s15, 2
      %s22 = sadd.s32 %s15, 1
      %s23 = ssub.s32 %s15, %s22
      %p24 = scmp.eq.s32.totalorder %s23, 0
      %s26 = sadd.s32 %s25, 1
      %s27 = scalar_select %p24, %s25, %s26
      %p30 = pneg %p24
      %p31 = scmp.eq.s32.totalorder %s15, 1
      %p32 = por %p30, %p31
      %p33 = scmp.ne.s32.totalorder %s25, %s28
      %p34 = scmp.eq.s32.totalorder %s15, 0
      %p35 = por %p33, %p34
      %p36 = scmp.ne.s32.totalorder %s25, %s28
      %p37 = scmp.eq.s32.totalorder %s20, 1
      %p38 = por %p36, %p37
      %p39 = scmp.ne.s32.totalorder %s28, %s29
      %p40 = scmp.eq.s32.totalorder %s20, 0
      %p41 = por %p39, %p40
      %p42 = scmp.ne.s32.totalorder %s28, %s29
      %p43 = scmp.eq.s32.totalorder %s21, 1
      %p44 = por %p42, %p43
      %p46 = scmp.ne.s32.totalorder %s29, %s45
      %p47 = scmp.eq.s32.totalorder %s21, 0
      %p48 = por %p46, %p47
      %s50 = sadd.s32 %s49, 1
      %p53 = scmp.eq.s32.totalorder %s15, 1
      %p54 = scmp.ne.s32.totalorder %s49, %s51
      %p55 = scmp.eq.s32.totalorder %s15, 0
      %p56 = por %p54, %p55
      %p57 = scmp.ne.s32.totalorder %s49, %s51
      %p58 = scmp.eq.s32.totalorder %s20, 1
      %p59 = por %p57, %p58
      %p60 = scmp.ne.s32.totalorder %s51, %s52
      %p61 = scmp.eq.s32.totalorder %s20, 0
      %p62 = por %p60, %p61
      %p63 = scmp.ne.s32.totalorder %s51, %s52
      %p64 = scmp.eq.s32.totalorder %s21, 1
      %p65 = por %p63, %p64
      %p67 = scmp.ne.s32.totalorder %s52, %s66
      %p68 = scmp.eq.s32.totalorder %s21, 0
      %p69 = por %p67, %p68
      %s71 = sadd.s32 %s70, 1
      %p74 = scmp.eq.s32.totalorder %s15, 1
      %p75 = scmp.ne.s32.totalorder %s70, %s72
      %p76 = scmp.eq.s32.totalorder %s15, 0
      %p77 = por %p75, %p76
      %p78 = scmp.ne.s32.totalorder %s70, %s72
      %p79 = scmp.eq.s32.totalorder %s20, 1
      %p80 = por %p78, %p79
      %p81 = scmp.ne.s32.totalorder %s72, %s73
      %p82 = scmp.eq.s32.totalorder %s20, 0
      %p83 = por %p81, %p82
      %p84 = scmp.ne.s32.totalorder %s72, %s73
      %p85 = scmp.eq.s32.totalorder %s21, 1
      %p86 = por %p84, %p85
      %p88 = scmp.ne.s32.totalorder %s73, %s87
      %p89 = scmp.eq.s32.totalorder %s21, 0
      %p90 = por %p88, %p89
      %s91 = ssub.s32 %s15, %s22
      %p92 = scmp.eq.s32.totalorder %s91, 0
      %s94 = sadd.s32 %s93, 1
      %s95 = scalar_select %p92, %s93, %s94
      %p98 = pneg %p92
      %p99 = scmp.eq.s32.totalorder %s15, 1
      %p100 = por %p98, %p99
      %p101 = scmp.ne.s32.totalorder %s93, %s96
      %p102 = scmp.eq.s32.totalorder %s15, 0
      %p103 = por %p101, %p102
      %p104 = scmp.ne.s32.totalorder %s93, %s96
      %p105 = scmp.eq.s32.totalorder %s20, 1
      %p106 = por %p104, %p105
      %p107 = scmp.ne.s32.totalorder %s96, %s97
      %p108 = scmp.eq.s32.totalorder %s20, 0
      %p109 = por %p107, %p108
      %p110 = scmp.ne.s32.totalorder %s96, %s97
      %p111 = scmp.eq.s32.totalorder %s21, 1
      %p112 = por %p110, %p111
      %p114 = scmp.ne.s32.totalorder %s97, %s113
      %p115 = scmp.eq.s32.totalorder %s21, 0
      %p116 = por %p114, %p115
      %p117 = scmp.le.s32.totalorder 1, %s15
      %p118 = scmp.lt.s32.totalorder %s15, 3
      %p119 = pnand %p117, %p118
      %p120 = pneg %p119
      // Predicated region
      $region9: #{tpu_custom_call.1} parent=5 // pred_check
        _
      $region10: #{tpu_custom_call.1} parent=5 // pred_check_branch
        %122 = sbr.rel (%p119) target = $region12
      $region11: #{tpu_custom_call.1} parent=5 // pred_region
        %s123 = ssub.s32 %s15, 1
        // Predicated region
        $region13: #{tpu_custom_call.1} parent=11 // pred_check
          %p124 = pneg %p62
        $region14: #{tpu_custom_call.1} parent=11 // pred_check_branch
          %126 = sbr.rel (%p124) target = $region16
        $region15: #{tpu_custom_call.1} parent=11 // pred_region
          _
        $region16: #{tpu_custom_call.1} parent=11 // pred_fallthru
          _
        // Predicated region
        $region17: #{tpu_custom_call.1} parent=11 // pred_check
          %p127 = pneg %p83
        $region18: #{tpu_custom_call.1} parent=11 // pred_check_branch
          %129 = sbr.rel (%p127) target = $region20
        $region19: #{tpu_custom_call.1} parent=11 // pred_region
          _
        $region20: #{tpu_custom_call.1} parent=11 // pred_fallthru
          _
      $region12: #{tpu_custom_call.1} parent=5 // pred_fallthru
        _
      %p130 = scmp.lt.s32.totalorder %s15, 2
      // Predicated region
      $region21: #{tpu_custom_call.1} parent=5 // pred_check
        %p131 = pneg %p130
      $region22: #{tpu_custom_call.1} parent=5 // pred_check_branch
        %133 = sbr.rel (%p131) target = $region24
      $region23: #{tpu_custom_call.1} parent=5 // pred_region
        // Predicated region
        $region25: #{tpu_custom_call.1} parent=23 // pred_check
          %p134 = pneg %p35
        $region26: #{tpu_custom_call.1} parent=23 // pred_check_branch
          %136 = sbr.rel (%p134) target = $region28
        $region27: #{tpu_custom_call.1} parent=23 // pred_region
          %s137 = sand.u32 %s25, 1
          %s138 = scalar_lea.sflag [#allocation4], %s137
          %s139 = sand.u32 %s25, 1
          %s140 = smul.addr %s139, 16
          %s141 = scalar_lea.vmem [#allocation3], %s140
          %s143 = ssub.s32 256, 256
          %144 = vsyncadd %s138, %s143
          %s145 = smul.addr %s15, 2
          %s146 = smul.addr %s145, 128
          %s147 = scalar_lea.hbm %s0, %s146
          %s149 = sshll.u32 %s141, 4
          %s150 = int_to_ptr.vmem [resolvable:$true] %s149
          %152 = dma.hbm_to_vmem [thread:$0]  %s147, 256, %s150, %s138
        $region28: #{tpu_custom_call.1} parent=23 // pred_fallthru
          _
      $region24: #{tpu_custom_call.1} parent=5 // pred_fallthru
        _
      %p153 = scmp.le.s32.totalorder 1, %s15
      %p154 = scmp.lt.s32.totalorder %s15, 3
      %p155 = pnand %p153, %p154
      %p156 = pneg %p155
      // Predicated region
      $region29: #{tpu_custom_call.1} parent=5 // pred_check
        _
      $region30: #{tpu_custom_call.1} parent=5 // pred_check_branch
        %158 = sbr.rel (%p155) target = $region32
      $region31: #{tpu_custom_call.1} parent=5 // pred_region
        %s159 = ssub.s32 %s15, 1
        %s160 = sand.u32 %s28, 1
        %s161 = scalar_lea.sflag [#allocation4], %s160
        %s162 = sand.u32 %s28, 1
        %s163 = smul.addr %s162, 16
        %s164 = scalar_lea.vmem [#allocation3], %s163
        // Predicated region
        $region33: #{tpu_custom_call.1} parent=31 // pred_check
          %p165 = pneg %p41
        $region34: #{tpu_custom_call.1} parent=31 // pred_check_branch
          %167 = sbr.rel (%p165) target = $region36
        $region35: #{tpu_custom_call.1} parent=31 // pred_region
          %168 = dma.done %s161, 256
        $region36: #{tpu_custom_call.1} parent=31 // pred_fallthru
          _
        %s169 = sand.u32 %s28, 1
        %s170 = scalar_lea.sflag [#allocation4], %s169
        %s171 = sand.u32 %s28, 1
        %s172 = smul.addr %s171, 16
        %s173 = scalar_lea.vmem [#allocation3], %s172
        %p174 = pneg %p41
        %p175 = pneg %p38
        %p176 = pneg %p62
        %p177 = pneg %p59
        %p178 = pneg %p83
        %p179 = pneg %p80
        %p180 = pneg %p109
        %p181 = pneg %p106
        %s182 = sand.u32 %s96, 1
        %s183 = scalar_lea.sflag [#allocation5], %s182
        %s184 = sand.u32 %s96, 1
        %s185 = smul.addr %s184, 16
        %s186 = scalar_lea.vmem [#allocation6], %s185
        %v187 = vld [vmem:[%s164] sm:$0xff]
        %v188 = vld [vmem:[%s164 + $0x8] sm:$0xff]
        %189 = vst [vmem:[#allocation2] sm:$0xff] 0.0
        %190 = vst [vmem:[#allocation2 + $0x8] sm:$0xff] 0.0
        %vm191 = vcmask 277504
        %192 = vst.msk [vmem:[#allocation2 + $0x10] sm:$0xff] %vm191, 0.0
        %195 = vrot.lane.b32.xlu0 %v187, 17
        %v196 = vpop.permute.xlu0 %195
        %197 = vrot.lane.b32.xlu0 %v188, 17
        %v198 = vpop.permute.xlu0 %197
        %vm199 = vcmask 138240
        %v200 = vsel %vm199, %v196, %v198
        %vm204 = vcmask 1047688
        %205 = vst.msk [vmem:[#allocation2] sm:$0xff] %vm204, %v196
        %206 = vst [vmem:[#allocation2 + $0x8] sm:$0xff] %v200
        %207 = vst.msk [vmem:[#allocation2 + $0x10] sm:$0xff] %vm199, %v198
        %v208 = vlaneseq
        %v209 = vand.u32 %v208, 127
        %v210 = vadd.s32 %v209, 128
        %vm211 = vcmp.lt.s32.totalorder %v209, 0
        %v212 = vsub.s32 0, %v209
        %v213 = vsel %vm211, %v212, %v209
        %v214 = vshrl.u32 %v213, 4
        %v215 = vand.u32 %v213, 15
        %v216 = vsub.s32 0, %v215
        %v217 = vsel %vm211, %v216, %v215
        %vm218 = vcmp.lt.s32.totalorder %v210, 0
        %v219 = vsub.s32 0, %v210
        %v220 = vsel %vm218, %v219, %v210
        %v221 = vshrl.u32 %v220, 4
        %v222 = vand.u32 %v220, 15
        %v223 = vsub.s32 0, %v222
        %v224 = vsel %vm218, %v223, %v222
        %vm225 = vcmp.ne.s32.totalorder %v217, 0
        %vm226 = vcmp.ne.s32.totalorder %v224, 0
        %vm227 = vcmp.lt.s32.totalorder %v217, 0
        %vm228 = vcmp.lt.s32.totalorder %v224, 0
        %vm229 = vmand %vm227, %vm225
        %vm230 = vmand %vm228, %vm226
        %v231 = vadd.s32 %v217, 16
        %v232 = vadd.s32 %v224, 16
        %v233 = vsel %vm229, %v231, %v217
        %v234 = vsel %vm230, %v232, %v224
        %vm235 = vcmp.ne.s32.totalorder %v233, 0
        %vm236 = vcmp.ne.s32.totalorder %v234, 0
        %vm237 = vcmp.ne.s32.totalorder %v233, 15
        %vm238 = vcmp.ne.s32.totalorder %v234, 15
        %v239 = vld [vmem:[#allocation2] sm:$0xff]
        %v240 = vld [vmem:[#allocation2 + $0x8] sm:$0xff]
        %v241 = vsel %vm235, %v239, 0.0
        %v242 = vsel %vm236, %v240, 0.0
        %v243 = vld [vmem:[#allocation2 + $0x10] sm:$0xff]
        %247 = vrot.lane.b32.xlu0 %v239, 126
        %v248 = vpop.permute.xlu0 %247
        %249 = vrot.lane.b32.xlu0 %v240, 126
        %v250 = vpop.permute.xlu0 %249
        %251 = vrot.lane.b32.xlu0 %v243, 126
        %v252 = vpop.permute.xlu0 %251
        %vm253 = vcmask 1031168
        %v254 = vsel %vm253, %v248, %v250
        %v255 = vsel %vm253, %v250, %v252
        %v258 = vsel %vm237, %v254, 0.0
        %v259 = vsel %vm238, %v255, 0.0
        %260 = vrot.lane.b32.xlu0 %v239, 112
        %v261 = vpop.permute.xlu0 %260
        %262 = vrot.lane.b32.xlu0 %v240, 112
        %v263 = vpop.permute.xlu0 %262
        %264 = vrot.lane.b32.xlu0 %v243, 112
        %v265 = vpop.permute.xlu0 %264
        %vm266 = vcmask 916480
        %v267 = vsel %vm266, %v261, %v263
        %v268 = vsel %vm266, %v263, %v265
        %v271 = vsel %vm235, %v267, 0.0
        %v272 = vsel %vm236, %v268, 0.0
        %273 = vrot.lane.b32.xlu0 %v239, 110
        %v274 = vpop.permute.xlu0 %273
        %275 = vrot.lane.b32.xlu0 %v240, 110
        %v276 = vpop.permute.xlu0 %275
        %277 = vrot.lane.b32.xlu0 %v243, 110
        %v278 = vpop.permute.xlu0 %277
        %vm279 = vcmask 900096
        %v280 = vsel %vm279, %v274, %v276
        %v281 = vsel %vm279, %v276, %v278
        %v284 = vsel %vm237, %v280, 0.0
        %v285 = vsel %vm238, %v281, 0.0
        %286 = vrot.lane.b32.xlu0 %v239, 96
        %v287 = vpop.permute.xlu0 %286
        %288 = vrot.lane.b32.xlu0 %v240, 96
        %v289 = vpop.permute.xlu0 %288
        %290 = vrot.lane.b32.xlu0 %v243, 96
        %v291 = vpop.permute.xlu0 %290
        %vm292 = vcmask 785408
        %v293 = vsel %vm292, %v287, %v289
        %v294 = vsel %vm292, %v289, %v291
        %v297 = vsel %vm235, %v293, 0.0
        %v298 = vsel %vm236, %v294, 0.0
        %299 = vrot.lane.b32.xlu0 %v239, 94
        %v300 = vpop.permute.xlu0 %299
        %301 = vrot.lane.b32.xlu0 %v240, 94
        %v302 = vpop.permute.xlu0 %301
        %303 = vrot.lane.b32.xlu0 %v243, 94
        %v304 = vpop.permute.xlu0 %303
        %vm305 = vcmask 769024
        %v306 = vsel %vm305, %v300, %v302
        %v307 = vsel %vm305, %v302, %v304
        %v310 = vsel %vm237, %v306, 0.0
        %v311 = vsel %vm238, %v307, 0.0
        %312 = vrot.lane.b32.xlu0 %v239, 127
        %v313 = vpop.permute.xlu0 %312
        %314 = vrot.lane.b32.xlu0 %v240, 127
        %v315 = vpop.permute.xlu0 %314
        %316 = vrot.lane.b32.xlu0 %v243, 127
        %v317 = vpop.permute.xlu0 %316
        %vm318 = vcmask 1039360
        %v319 = vsel %vm318, %v313, %v315
        %v320 = vsel %vm318, %v315, %v317
        %323 = vrot.lane.b32.xlu0 %v239, 111
        %v324 = vpop.permute.xlu0 %323
        %325 = vrot.lane.b32.xlu0 %v240, 111
        %v326 = vpop.permute.xlu0 %325
        %327 = vrot.lane.b32.xlu0 %v243, 111
        %v328 = vpop.permute.xlu0 %327
        %vm329 = vcmask 908288
        %v330 = vsel %vm329, %v324, %v326
        %v331 = vsel %vm329, %v326, %v328
        %334 = vrot.lane.b32.xlu0 %v239, 95
        %v335 = vpop.permute.xlu0 %334
        %336 = vrot.lane.b32.xlu0 %v240, 95
        %v337 = vpop.permute.xlu0 %336
        %338 = vrot.lane.b32.xlu0 %v243, 95
        %v339 = vpop.permute.xlu0 %338
        %vm340 = vcmask 777216
        %v341 = vsel %vm340, %v335, %v337
        %v342 = vsel %vm340, %v337, %v339
        %v345 = vld [vmem:[%s1] sm:$0xff]
        %v346 = vld [vmem:[%s2] sm:$0xff]
        %348 = vset.pattern.permute.xlu0 0
        %349 = vperm.xlu0 %348, %v346
        %v350 = vpop.permute.xlu0 %349
        %vm352 = vcmask 588800
        %v354 = vsel %vm352, %v345, 0
        %356 = vmatprep.subr.mxu0 %v242
        %357 = vmatpush1.msra.mxu0 %v241
        %358 = vmatprep.subr.mxu0 %v320
        %359 = vmatpush1.msra.mxu0 %v319
        %360 = vmatprep.subr.mxu0 %v259
        %361 = vmatpush1.msra.mxu0 %v258
        %362 = vmatprep.subr.mxu0 %v272
        %363 = vmatpush1.msra.mxu0 %v271
        %364 = vmatprep.subr.mxu0 %v331
        %365 = vmatpush1.msra.mxu0 %v330
        %366 = vmatprep.subr.mxu0 %v285
        %367 = vmatpush1.msra.mxu0 %v284
        %368 = vmatprep.subr.mxu0 %v298
        %369 = vmatpush1.msra.mxu0 %v297
        %370 = vmatprep.subr.mxu0 %v342
        %371 = vmatpush1.msra.mxu0 %v341
        %372 = vmatprep.subr.mxu0 %v311
        %373 = vmatpush1.msra.mxu0 %v310
        %374 = vmatprep.subr.mxu0 0.0
        %375 = vmatpush1.msra.mxu0 0.0
        %376 = vmatprep.subr.mxu0 0.0
        %377 = vmatpush1.msra.mxu0 0.0
        %378 = vmatprep.subr.mxu0 0.0
        %379 = vmatpush1.msra.mxu0 0.0
        %380 = vmatprep.subr.mxu0 0.0
        %381 = vmatpush1.msra.mxu0 0.0
        %382 = vmatprep.subr.mxu0 0.0
        %383 = vmatpush1.msra.mxu0 0.0
        %384 = vmatprep.subr.mxu0 0.0
        %385 = vmatpush1.msra.mxu0 0.0
        %386 = vmatprep.subr.mxu0 0.0
        %387 = vmatpush1.msra.mxu0 0.0
        %388 = vmatprep.subr.mxu0 0.0
        %389 = vmatpush1.msra.mxu0 0.0
        %390 = vmatprep.subr.mxu0 0.0
        %391 = vmatpush1.msra.mxu0 0.0
        %392 = vmatprep.subr.mxu0 0.0
        %393 = vmatpush1.msra.mxu0 0.0
        %394 = vmatprep.subr.mxu0 0.0
        %395 = vmatpush1.msra.mxu0 0.0
        %396 = vmatprep.subr.mxu0 0.0
        %397 = vmatpush1.msra.mxu0 0.0
        %398 = vmatprep.subr.mxu0 0.0
        %399 = vmatpush1.msra.mxu0 0.0
        %400 = vmatprep.subr.mxu0 0.0
        %401 = vmatpush1.msra.mxu0 0.0
        %402 = vmatprep.subr.mxu0 0.0
        %403 = vmatpush1.msra.mxu0 0.0
        %404 = vmatprep.subr.mxu0 0.0
        %405 = vmatpush1.msra.mxu0 0.0
        %406 = vmatprep.subr.mxu0 0.0
        %407 = vmatpush1.msra.mxu0 0.0
        %408 = vmatprep.subr.mxu0 0.0
        %409 = vmatpush1.msra.mxu0 0.0
        %410 = vmatprep.subr.mxu0 0.0
        %411 = vmatpush1.msra.mxu0 0.0
        %412 = vmatprep.subr.mxu0 0.0
        %413 = vmatpush1.msra.mxu0 0.0
        %414 = vmatprep.subr.mxu0 0.0
        %415 = vmatpush1.msra.mxu0 0.0
        %416 = vmatprep.subr.mxu0 0.0
        %417 = vmatpush1.msra.mxu0 0.0
        %418 = vmatprep.subr.mxu0 0.0
        %419 = vmatpush1.msra.mxu0 0.0
        %420 = vmatprep.mubr.f32.mxu0 0.0
        %421 = vmatmul.mubr.f32.gmra.mrb[0].mxu0 %v354
        %v422 = vpop.f32.mrb[0].mxu0
        %v423 = vadd.f32 %v350, %v422
        %v424 = vpop.f32.mrb[0].mxu0
        %v425 = vadd.f32 %v350, %v424
        %426 = vdwg.mxu0
        %v427 = vmax.f32 %v423, 0.0
        %v428 = vmax.f32 %v425, 0.0
        %431 = vrot.lane.b32.xlu0 %v427, 17
        %v432 = vpop.permute.xlu0 %431
        %433 = vrot.lane.b32.xlu0 %v428, 17
        %v434 = vpop.permute.xlu0 %433
        %v435 = vsel %vm199, %v432, %v434
        %439 = vst.msk [vmem:[#allocation2] sm:$0xff] %vm204, %v432
        %440 = vst [vmem:[#allocation2 + $0x8] sm:$0xff] %v435
        %441 = vst.msk [vmem:[#allocation2 + $0x10] sm:$0xff] %vm199, %v434
        %v442 = vld [vmem:[#allocation2] sm:$0xff]
        %v443 = vld [vmem:[#allocation2 + $0x8] sm:$0xff]
        %v444 = vsel %vm235, %v442, 0.0
        %v445 = vsel %vm236, %v443, 0.0
        %v446 = vld [vmem:[#allocation2 + $0x10] sm:$0xff]
        %450 = vrot.lane.b32.xlu0 %v442, 126
        %v451 = vpop.permute.xlu0 %450
        %452 = vrot.lane.b32.xlu0 %v443, 126
        %v453 = vpop.permute.xlu0 %452
        %454 = vrot.lane.b32.xlu0 %v446, 126
        %v455 = vpop.permute.xlu0 %454
        %v456 = vsel %vm253, %v451, %v453
        %v457 = vsel %vm253, %v453, %v455
        %v460 = vsel %vm237, %v456, 0.0
        %v461 = vsel %vm238, %v457, 0.0
        %462 = vrot.lane.b32.xlu0 %v442, 112
        %v463 = vpop.permute.xlu0 %462
        %464 = vrot.lane.b32.xlu0 %v443, 112
        %v465 = vpop.permute.xlu0 %464
        %466 = vrot.lane.b32.xlu0 %v446, 112
        %v467 = vpop.permute.xlu0 %466
        %v468 = vsel %vm266, %v463, %v465
        %v469 = vsel %vm266, %v465, %v467
        %v472 = vsel %vm235, %v468, 0.0
        %v473 = vsel %vm236, %v469, 0.0
        %474 = vrot.lane.b32.xlu0 %v442, 110
        %v475 = vpop.permute.xlu0 %474
        %476 = vrot.lane.b32.xlu0 %v443, 110
        %v477 = vpop.permute.xlu0 %476
        %478 = vrot.lane.b32.xlu0 %v446, 110
        %v479 = vpop.permute.xlu0 %478
        %v480 = vsel %vm279, %v475, %v477
        %v481 = vsel %vm279, %v477, %v479
        %v484 = vsel %vm237, %v480, 0.0
        %v485 = vsel %vm238, %v481, 0.0
        %486 = vrot.lane.b32.xlu0 %v442, 96
        %v487 = vpop.permute.xlu0 %486
        %488 = vrot.lane.b32.xlu0 %v443, 96
        %v489 = vpop.permute.xlu0 %488
        %490 = vrot.lane.b32.xlu0 %v446, 96
        %v491 = vpop.permute.xlu0 %490
        %v492 = vsel %vm292, %v487, %v489
        %v493 = vsel %vm292, %v489, %v491
        %v496 = vsel %vm235, %v492, 0.0
        %v497 = vsel %vm236, %v493, 0.0
        %498 = vrot.lane.b32.xlu0 %v442, 94
        %v499 = vpop.permute.xlu0 %498
        %500 = vrot.lane.b32.xlu0 %v443, 94
        %v501 = vpop.permute.xlu0 %500
        %502 = vrot.lane.b32.xlu0 %v446, 94
        %v503 = vpop.permute.xlu0 %502
        %v504 = vsel %vm305, %v499, %v501
        %v505 = vsel %vm305, %v501, %v503
        %v508 = vsel %vm237, %v504, 0.0
        %v509 = vsel %vm238, %v505, 0.0
        %510 = vrot.lane.b32.xlu0 %v442, 127
        %v511 = vpop.permute.xlu0 %510
        %512 = vrot.lane.b32.xlu0 %v443, 127
        %v513 = vpop.permute.xlu0 %512
        %514 = vrot.lane.b32.xlu0 %v446, 127
        %v515 = vpop.permute.xlu0 %514
        %v516 = vsel %vm318, %v511, %v513
        %v517 = vsel %vm318, %v513, %v515
        %520 = vrot.lane.b32.xlu0 %v442, 111
        %v521 = vpop.permute.xlu0 %520
        %522 = vrot.lane.b32.xlu0 %v443, 111
        %v523 = vpop.permute.xlu0 %522
        %524 = vrot.lane.b32.xlu0 %v446, 111
        %v525 = vpop.permute.xlu0 %524
        %v526 = vsel %vm329, %v521, %v523
        %v527 = vsel %vm329, %v523, %v525
        %530 = vrot.lane.b32.xlu0 %v442, 95
        %v531 = vpop.permute.xlu0 %530
        %532 = vrot.lane.b32.xlu0 %v443, 95
        %v533 = vpop.permute.xlu0 %532
        %534 = vrot.lane.b32.xlu0 %v446, 95
        %v535 = vpop.permute.xlu0 %534
        %v536 = vsel %vm340, %v531, %v533
        %v537 = vsel %vm340, %v533, %v535
        %s540 = scalar_lea.vmem %s1, 8
        %v541 = vld [vmem:[%s540] sm:$0xff]
        %s542 = scalar_lea.vmem %s2, 8
        %v543 = vld [vmem:[%s542] sm:$0xff]
        %545 = vset.pattern.permute.xlu0 0
        %546 = vperm.xlu0 %545, %v543
        %v547 = vpop.permute.xlu0 %546
        %v550 = vsel %vm352, %v541, 0
        %552 = vmatprep.subr.mxu0 %v445
        %553 = vmatpush1.msra.mxu0 %v444
        %554 = vmatprep.subr.mxu0 %v517
        %555 = vmatpush1.msra.mxu0 %v516
        %556 = vmatprep.subr.mxu0 %v461
        %557 = vmatpush1.msra.mxu0 %v460
        %558 = vmatprep.subr.mxu0 %v473
        %559 = vmatpush1.msra.mxu0 %v472
        %560 = vmatprep.subr.mxu0 %v527
        %561 = vmatpush1.msra.mxu0 %v526
        %562 = vmatprep.subr.mxu0 %v485
        %563 = vmatpush1.msra.mxu0 %v484
        %564 = vmatprep.subr.mxu0 %v497
        %565 = vmatpush1.msra.mxu0 %v496
        %566 = vmatprep.subr.mxu0 %v537
        %567 = vmatpush1.msra.mxu0 %v536
        %568 = vmatprep.subr.mxu0 %v509
        %569 = vmatpush1.msra.mxu0 %v508
        %570 = vmatprep.subr.mxu0 0.0
        %571 = vmatpush1.msra.mxu0 0.0
        %572 = vmatprep.subr.mxu0 0.0
        %573 = vmatpush1.msra.mxu0 0.0
        %574 = vmatprep.subr.mxu0 0.0
        %575 = vmatpush1.msra.mxu0 0.0
        %576 = vmatprep.subr.mxu0 0.0
        %577 = vmatpush1.msra.mxu0 0.0
        %578 = vmatprep.subr.mxu0 0.0
        %579 = vmatpush1.msra.mxu0 0.0
        %580 = vmatprep.subr.mxu0 0.0
        %581 = vmatpush1.msra.mxu0 0.0
        %582 = vmatprep.subr.mxu0 0.0
        %583 = vmatpush1.msra.mxu0 0.0
        %584 = vmatprep.subr.mxu0 0.0
        %585 = vmatpush1.msra.mxu0 0.0
        %586 = vmatprep.subr.mxu0 0.0
        %587 = vmatpush1.msra.mxu0 0.0
        %588 = vmatprep.subr.mxu0 0.0
        %589 = vmatpush1.msra.mxu0 0.0
        %590 = vmatprep.subr.mxu0 0.0
        %591 = vmatpush1.msra.mxu0 0.0
        %592 = vmatprep.subr.mxu0 0.0
        %593 = vmatpush1.msra.mxu0 0.0
        %594 = vmatprep.subr.mxu0 0.0
        %595 = vmatpush1.msra.mxu0 0.0
        %596 = vmatprep.subr.mxu0 0.0
        %597 = vmatpush1.msra.mxu0 0.0
        %598 = vmatprep.subr.mxu0 0.0
        %599 = vmatpush1.msra.mxu0 0.0
        %600 = vmatprep.subr.mxu0 0.0
        %601 = vmatpush1.msra.mxu0 0.0
        %602 = vmatprep.subr.mxu0 0.0
        %603 = vmatpush1.msra.mxu0 0.0
        %604 = vmatprep.subr.mxu0 0.0
        %605 = vmatpush1.msra.mxu0 0.0
        %606 = vmatprep.subr.mxu0 0.0
        %607 = vmatpush1.msra.mxu0 0.0
        %608 = vmatprep.subr.mxu0 0.0
        %609 = vmatpush1.msra.mxu0 0.0
        %610 = vmatprep.subr.mxu0 0.0
        %611 = vmatpush1.msra.mxu0 0.0
        %612 = vmatprep.subr.mxu0 0.0
        %613 = vmatpush1.msra.mxu0 0.0
        %614 = vmatprep.subr.mxu0 0.0
        %615 = vmatpush1.msra.mxu0 0.0
        %616 = vmatprep.mubr.f32.mxu0 0.0
        %617 = vmatmul.mubr.f32.gmra.mrb[0].mxu0 %v550
        %v618 = vpop.f32.mrb[0].mxu0
        %v619 = vadd.f32 %v547, %v618
        %v620 = vpop.f32.mrb[0].mxu0
        %v621 = vadd.f32 %v547, %v620
        %622 = vdwg.mxu0
        %v623 = vadd.f32 %v619, %v187
        %v624 = vadd.f32 %v621, %v188
        %v625 = vmax.f32 %v623, 0.0
        %v626 = vmax.f32 %v624, 0.0
        %627 = vst [vmem:[%s186] sm:$0xff] %v625
        %628 = vst [vmem:[%s186 + $0x8] sm:$0xff] %v626
        %s629 = sand.u32 %s96, 1
        %s630 = scalar_lea.sflag [#allocation5], %s629
        %s631 = sand.u32 %s96, 1
        %s632 = smul.addr %s631, 16
        %s633 = scalar_lea.vmem [#allocation6], %s632
        // Predicated region
        $region37: #{tpu_custom_call.1} parent=31 // pred_check
          %p634 = pneg %p106
        $region38: #{tpu_custom_call.1} parent=31 // pred_check_branch
          %636 = sbr.rel (%p634) target = $region40
        $region39: #{tpu_custom_call.1} parent=31 // pred_region
          %s638 = ssub.s32 256, 256
          %639 = vsyncadd %s630, %s638
          %s640 = smul.addr %s20, 2
          %s641 = smul.addr %s640, 128
          %s642 = scalar_lea.hbm %s3, %s641
          %s644 = sshll.u32 %s633, 4
          %s645 = int_to_ptr.vmem [resolvable:$true] %s644
          %647 = dma.vmem_to_hbm [thread:$0]  %s645, 256, %s642, %s630
        $region40: #{tpu_custom_call.1} parent=31 // pred_fallthru
          _
      $region32: #{tpu_custom_call.1} parent=5 // pred_fallthru
        _
      %p648 = scmp.le.s32.totalorder 2, %s15
      // Predicated region
      $region41: #{tpu_custom_call.1} parent=5 // pred_check
        %p649 = pneg %p648
      $region42: #{tpu_custom_call.1} parent=5 // pred_check_branch
        %651 = sbr.rel (%p649) target = $region44
      $region43: #{tpu_custom_call.1} parent=5 // pred_region
        %s652 = ssub.s32 %s15, 2
        // Predicated region
        $region45: #{tpu_custom_call.1} parent=43 // pred_check
          %p653 = pneg %p112
        $region46: #{tpu_custom_call.1} parent=43 // pred_check_branch
          %655 = sbr.rel (%p653) target = $region48
        $region47: #{tpu_custom_call.1} parent=43 // pred_region
          %s656 = sand.u32 %s97, 1
          %s657 = scalar_lea.sflag [#allocation5], %s656
          %s658 = sand.u32 %s97, 1
          %s659 = smul.addr %s658, 16
          %s660 = scalar_lea.vmem [#allocation6], %s659
          %661 = dma.done %s657, 256
        $region48: #{tpu_custom_call.1} parent=43 // pred_fallthru
          _
      $region44: #{tpu_custom_call.1} parent=5 // pred_fallthru
        _
    $region6: #{tpu_custom_call.1} parent=1 // loop_footer
      %s19 = sadd.s32 1, %s15
    $region7: #{tpu_custom_call.1} parent=1 // loop_footer_branch
      %14 = sbr.rel target = $region3
    $region8: #{tpu_custom_call.1} parent=1 // loop_exit
      _
    %662 = vsyncpa [#allocation4], 1
    %s663 = scalar_lea.sflag [#allocation4], 1
    %664 = vsyncpa %s663, 1
    %665 = vsyncpa [#allocation5], 1
    %s666 = scalar_lea.sflag [#allocation5], 1
    %667 = vsyncpa %s666, 1

</llo_original>
